<compile_context>
chip_gen: v7x
topology: tpu7x:2x2x1
jax: 0.10.0
libtpu: 0.0.40
codegen_flags: <defaults>
</compile_context>

<pallas_src>
import math

import jax
import jax.numpy as jnp
from jax import lax
from jax.experimental import pallas as pl
from jax.experimental.pallas import tpu as pltpu  # noqa: F401  (TPU backend)

# ---------------------------- model dimensions ----------------------------
B = 2            # batch
S = 8            # sequence length
D = 32           # hidden size
F = 64           # FFN intermediate size
VOCAB = 64       # vocab size
C_IN = 4         # image channels
H = W = 16       # image spatial
HW = H * W       # 256 pixels  (lane-dense axis)
C_MID = 16       # seg head intermediate channels
NUM_CLASSES = 4  # segmentation classes
BS = B * S       # batch-stacked sequence length

# -------------------- packed-parameter slab layout (rows) --------------------
# One (P_ROWS, P_LANES) f32 slab holds every parameter; all row offsets are
# multiples of 8 so each in-kernel view is a clean static sub-tile load.
P_LANES = 3 * D                      # 96 (widest tensor: fused QKV)
R_WQKV = 0                           # (D, 3D)
R_WO   = R_WQKV + D                  # (D, D)
R_W1   = R_WO + D                    # (D, F)
R_W2   = R_W1 + D                    # (F, D)
R_WFS  = R_W2 + F                    # (B*C_MID, D)  FiLM scale rows (tiled over batch)
R_WFH  = R_WFS + B * C_MID           # (B*C_MID, D)  FiLM shift rows
R_WC1  = R_WFH + B * C_MID           # (B*C_MID, B*C_IN)  block-diag conv1
R_WC2  = R_WC1 + B * C_MID           # (B*NUM_CLASSES, B*C_MID)  block-diag conv2
R_TOK  = R_WC2 + B * NUM_CLASSES     # (VOCAB, D)
R_POS  = R_TOK + VOCAB               # (BS, D)  position embedding tiled over batch
R_VEC  = R_POS + BS                  # (8, F): b1 | b2 | ln1_g | ln1_b | ln2_g | ln2_b
R_COL  = R_VEC + 8                   # (B*C_MID, 4): bfilm_s | bfilm_h | bc1 | bc2
P_ROWS = R_COL + B * C_MID           # 384


def _layernorm(x, gamma, beta, eps=1e-5):
    mu = jnp.mean(x, axis=-1, keepdims=True)
    var = jnp.mean(jnp.square(x - mu), axis=-1, keepdims=True)
    return (x - mu) * lax.rsqrt(var + eps) * gamma + beta


# ============================ fused forward kernel ============================
def fused_kernel(sent_ref, bias_ref, img_ref, p_ref, out_ref):
    # ---- unpack the single parameter slab (static sub-tile views) ----
    wqkv = p_ref[R_WQKV:R_WQKV + D, 0:3 * D]
    wo   = p_ref[R_WO:R_WO + D, 0:D]
    w1   = p_ref[R_W1:R_W1 + D, 0:F]
    w2   = p_ref[R_W2:R_W2 + F, 0:D]
    tok  = p_ref[R_TOK:R_TOK + VOCAB, 0:D]
    pos  = p_ref[R_POS:R_POS + BS, 0:D]
    vec  = p_ref[R_VEC:R_VEC + 8, 0:F]
    b1, b2       = vec[0:1, 0:F], vec[1:2, 0:D]
    ln1_g, ln1_b = vec[2:3, 0:D], vec[3:4, 0:D]
    ln2_g, ln2_b = vec[4:5, 0:D], vec[5:6, 0:D]

    # ---- token + position embedding (gather as a one-hot matmul, stays on MXU) ----
    tok_ids = sent_ref[...]                                        # (BS, 1) int32
    onehot = (lax.broadcasted_iota(jnp.int32, (BS, VOCAB), 1)
              == tok_ids).astype(jnp.float32)                      # (BS, VOCAB)
    x = jnp.dot(onehot, tok, preferred_element_type=jnp.float32) + pos   # (BS, D)

    # ---- single-head self-attention, fused QKV projection ----
    # (1/sqrt(D) attention scale is folded into the Q columns of wqkv at init)
    qkv = jnp.dot(x, wqkv, preferred_element_type=jnp.float32)     # (BS, 3D)
    q, k, v = qkv[:, 0:D], qkv[:, D:2 * D], qkv[:, 2 * D:3 * D]

    # q·kᵀ without an explicit transpose + precomputed additive mask
    scores = lax.dot_general(q, k, (((1,), (1,)), ((), ())),
                             preferred_element_type=jnp.float32)   # (BS, BS)
    scores = scores + bias_ref[...]

    # exact softmax
    scores = scores - jnp.max(scores, axis=-1, keepdims=True)
    probs = jnp.exp(scores)
    probs = probs / jnp.sum(probs, axis=-1, keepdims=True)

    attn = jnp.dot(probs, v, preferred_element_type=jnp.float32)
    attn = jnp.dot(attn, wo, preferred_element_type=jnp.float32)
    h = _layernorm(x + attn, ln1_g, ln1_b)

    # ---- feed forward ----
    ffn = jnp.dot(h, w1, preferred_element_type=jnp.float32) + b1
    ffn = jax.nn.gelu(ffn)
    ffn = jnp.dot(ffn, w2, preferred_element_type=jnp.float32) + b2
    h = _layernorm(h + ffn, ln2_g, ln2_b)                          # (BS, D)

    # ---- CLS rows (0, S, ...) via static slices, broadcast-expanded for FiLM ----
    emb_rows = jnp.concatenate(
        [jnp.broadcast_to(h[b * S:b * S + 1, :], (C_MID, D)) for b in range(B)],
        axis=0)                                                    # (B*C_MID, D)

    wfs = p_ref[R_WFS:R_WFS + B * C_MID, 0:D]                      # FiLM scale rows
    wfh = p_ref[R_WFH:R_WFH + B * C_MID, 0:D]                      # FiLM shift rows
    col = p_ref[R_COL:R_COL + B * C_MID, 0:4]                      # column biases
    scale_col = jnp.sum(emb_rows * wfs, axis=-1, keepdims=True) + col[:, 0:1]  # (B*C_MID,1)
    shift_col = jnp.sum(emb_rows * wfh, axis=-1, keepdims=True) + col[:, 1:2]

    # ---- segmentation head: block-diagonal 1x1 convs, pixels on the lane axis ----
    wc1 = p_ref[R_WC1:R_WC1 + B * C_MID, 0:B * C_IN]               # (B*C_MID, B*C_IN)
    wc2 = p_ref[R_WC2:R_WC2 + B * NUM_CLASSES, 0:B * C_MID]        # (B*NC, B*C_MID)
    hs = jnp.dot(wc1, img_ref[...], preferred_element_type=jnp.float32) + col[:, 2:3]
    hs = jax.nn.relu(hs * (1.0 + scale_col) + shift_col)           # (B*C_MID, HW)
    # single lane-dense full-tile store: (B*NUM_CLASSES, HW) = (8, 256)
    out_ref[...] = (jnp.dot(wc2, hs, preferred_element_type=jnp.float32)
                    + col[0:B * NUM_CLASSES, 3:4])


# ============================== parameters ==================================
def _blkdiag(w, nblocks):
    r, c = w.shape
    out = jnp.zeros((nblocks * r, nblocks * c), w.dtype)
    for i in range(nblocks):
        out = out.at[i * r:(i + 1) * r, i * c:(i + 1) * c].set(w)
    return out


def init_params(key):
    keys = jax.random.split(key, 11)
    std = lambda fan_in: 1.0 / math.sqrt(fan_in)

    tok = jax.random.normal(keys[0], (VOCAB, D), jnp.float32) * 0.02
    pos = jax.random.normal(keys[1], (S, D), jnp.float32) * 0.02
    wq = jax.random.normal(keys[2], (D, D), jnp.float32) * std(D)
    wk = jax.random.normal(keys[3], (D, D), jnp.float32) * std(D)
    wv = jax.random.normal(keys[4], (D, D), jnp.float32) * std(D)
    wo = jax.random.normal(keys[5], (D, D), jnp.float32) * std(D)
    w1 = jax.random.normal(keys[6], (D, F), jnp.float32) * std(D)
    w2 = jax.random.normal(keys[7], (F, D), jnp.float32) * std(F)
    wfilm_t = jax.random.normal(keys[8], (2 * C_MID, D), jnp.float32) * std(D)
    wc1_t = jax.random.normal(keys[9], (C_MID, C_IN), jnp.float32) * std(C_IN)
    wc2_t = jax.random.normal(keys[10], (NUM_CLASSES, C_MID), jnp.float32) * std(C_MID)

    # fused QKV with the attention scale folded into the Q columns
    wqkv = jnp.concatenate([wq * (1.0 / math.sqrt(D)), wk, wv], axis=1)   # (D, 3D)

    def put(slab, row, a):
        return slab.at[row:row + a.shape[0], 0:a.shape[1]].set(a)

    pslab = jnp.zeros((P_ROWS, P_LANES), jnp.float32)
    pslab = put(pslab, R_WQKV, wqkv)
    pslab = put(pslab, R_WO, wo)
    pslab = put(pslab, R_W1, w1)
    pslab = put(pslab, R_W2, w2)
    pslab = put(pslab, R_WFS, jnp.tile(wfilm_t[:C_MID], (B, 1)))          # (B*C_MID, D)
    pslab = put(pslab, R_WFH, jnp.tile(wfilm_t[C_MID:], (B, 1)))
    pslab = put(pslab, R_WC1, _blkdiag(wc1_t, B))                          # (B*C_MID, B*C_IN)
    pslab = put(pslab, R_WC2, _blkdiag(wc2_t, B))                          # (B*NC, B*C_MID)
    pslab = put(pslab, R_TOK, tok)
    pslab = put(pslab, R_POS, jnp.tile(pos, (B, 1)))                       # (BS, D)

    # small bias / layernorm vectors: b1, b2, ln1_g, ln1_b, ln2_g, ln2_b
    vec = jnp.zeros((8, P_LANES), jnp.float32)
    vec = vec.at[2, 0:D].set(1.0)   # ln1 gamma
    vec = vec.at[4, 0:D].set(1.0)   # ln2 gamma
    pslab = pslab.at[R_VEC:R_VEC + 8, :].set(vec)
    # R_COL block (FiLM / conv biases) stays zero.
    return pslab


# ============================== full model ==================================
@jax.jit
def model_forward(sent, attention, img, pslab):
    # layout-free glue (contiguous / metadata-only reshapes) + mask precompute
    sent_col = sent.reshape(BS, 1).astype(jnp.int32)
    keep = attention.reshape(BS).astype(jnp.float32)
    batch_id = jnp.arange(BS, dtype=jnp.int32) // S
    allowed = (batch_id[:, None] == batch_id[None, :]) & (keep[None, :] > 0.5)
    attn_bias = jnp.where(allowed, 0.0, -1e9).astype(jnp.float32)   # (BS, BS)
    img2d = img.reshape(B * C_IN, HW)                               # NCHW -> (B*C_IN, H*W)

    out2d = pl.pallas_call(
        fused_kernel,
        out_shape=jax.ShapeDtypeStruct((B * NUM_CLASSES, HW), jnp.float32),
    )(sent_col, attn_bias, img2d, pslab)

    # (B*NUM_CLASSES, H*W) is already NCHW-contiguous: pure reshape, no transpose.
    return out2d.reshape(B, NUM_CLASSES, H, W)


if __name__ == "__main__":
    key = jax.random.PRNGKey(0)
    k_sent, k_img, k_param = jax.random.split(key, 3)

    sent = jax.random.randint(k_sent, (B, S), 0, VOCAB, dtype=jnp.int32)
    attention = jnp.concatenate(
        [jnp.ones((B, S - 2), jnp.int32), jnp.zeros((B, 2), jnp.int32)], axis=1)
    img = jax.random.normal(k_img, (B, C_IN, H, W), jnp.float32)

    pslab = init_params(k_param)

    out = model_forward(sent, attention, img, pslab)
    out = jax.block_until_ready(out)
    assert out.shape == (B, NUM_CLASSES, H, W), out.shape
    assert bool(jnp.all(jnp.isfinite(out)))
    print("KERNEL_OK")
</pallas_src>

<mosaic_0001>
module attributes {stable_mosaic.version = 11 : i64} {
  func.func @fused_kernel(%arg0: memref<16x1xi32, #tpu.memory_space<vmem>>, %arg1: memref<16x16xf32, #tpu.memory_space<vmem>>, %arg2: memref<8x256xf32, #tpu.memory_space<vmem>>, %arg3: memref<384x96xf32, #tpu.memory_space<vmem>>, %arg4: memref<8x256xf32, #tpu.memory_space<vmem>>) attributes {dimension_semantics = [], scalar_prefetch = 0 : i64, scratch_operands = 0 : i64, tpu.core_type = #tpu.core_type<tc>} {
    %c0 = arith.constant 0 : index
    %c0_0 = arith.constant 0 : index
    %0 = vector.load %arg3[%c0, %c0_0] : memref<384x96xf32, #tpu.memory_space<vmem>>, vector<32x96xf32>
    %c32 = arith.constant 32 : index
    %c0_1 = arith.constant 0 : index
    %1 = vector.load %arg3[%c32, %c0_1] : memref<384x96xf32, #tpu.memory_space<vmem>>, vector<32x32xf32>
    %c64 = arith.constant 64 : index
    %c0_2 = arith.constant 0 : index
    %2 = vector.load %arg3[%c64, %c0_2] : memref<384x96xf32, #tpu.memory_space<vmem>>, vector<32x64xf32>
    %c96 = arith.constant 96 : index
    %c0_3 = arith.constant 0 : index
    %3 = vector.load %arg3[%c96, %c0_3] : memref<384x96xf32, #tpu.memory_space<vmem>>, vector<64x32xf32>
    %c264 = arith.constant 264 : index
    %c0_4 = arith.constant 0 : index
    %4 = vector.load %arg3[%c264, %c0_4] : memref<384x96xf32, #tpu.memory_space<vmem>>, vector<64x32xf32>
    %c328 = arith.constant 328 : index
    %c0_5 = arith.constant 0 : index
    %5 = vector.load %arg3[%c328, %c0_5] : memref<384x96xf32, #tpu.memory_space<vmem>>, vector<16x32xf32>
    %c344 = arith.constant 344 : index
    %c0_6 = arith.constant 0 : index
    %6 = vector.load %arg3[%c344, %c0_6] : memref<384x96xf32, #tpu.memory_space<vmem>>, vector<8x64xf32>
    %7 = vector.extract_strided_slice %6 {offsets = [0, 0], sizes = [1, 64], strides = [1, 1]} : vector<8x64xf32> to vector<1x64xf32>
    %8 = vector.extract_strided_slice %6 {offsets = [1, 0], sizes = [1, 32], strides = [1, 1]} : vector<8x64xf32> to vector<1x32xf32>
    %9 = vector.extract_strided_slice %6 {offsets = [2, 0], sizes = [1, 32], strides = [1, 1]} : vector<8x64xf32> to vector<1x32xf32>
    %10 = vector.extract_strided_slice %6 {offsets = [3, 0], sizes = [1, 32], strides = [1, 1]} : vector<8x64xf32> to vector<1x32xf32>
    %11 = vector.extract_strided_slice %6 {offsets = [4, 0], sizes = [1, 32], strides = [1, 1]} : vector<8x64xf32> to vector<1x32xf32>
    %12 = vector.extract_strided_slice %6 {offsets = [5, 0], sizes = [1, 32], strides = [1, 1]} : vector<8x64xf32> to vector<1x32xf32>
    %c0_7 = arith.constant 0 : index
    %c0_8 = arith.constant 0 : index
    %13 = vector.load %arg0[%c0_7, %c0_8] : memref<16x1xi32, #tpu.memory_space<vmem>>, vector<16x1xi32>
    %14 = tpu.iota {dimensions = array<i32: 1>} : vector<16x64xi32>
    %15 = vector.broadcast %13 : vector<16x1xi32> to vector<16x64xi32>
    %16 = arith.cmpi eq, %14, %15 : vector<16x64xi32>
    %17 = arith.extui %16 : vector<16x64xi1> to vector<16x64xi32>
    %18 = arith.sitofp %17 : vector<16x64xi32> to vector<16x64xf32>
    %cst = arith.constant dense<0.000000e+00> : vector<16x32xf32>
    %19 = tpu.matmul %18, %4, %cst {dimension_numbers = #tpu.dot_dimension_numbers<[1], [0], [0], [1], [0, 0, 1, 1], [], []>} : vector<16x64xf32>, vector<64x32xf32>, vector<16x32xf32> -> vector<16x32xf32>
    %20 = arith.addf %19, %5 : vector<16x32xf32>
    %cst_9 = arith.constant dense<0.000000e+00> : vector<16x96xf32>
    %21 = tpu.matmul %20, %0, %cst_9 {dimension_numbers = #tpu.dot_dimension_numbers<[1], [0], [0], [1], [0, 0, 1, 1], [], []>} : vector<16x32xf32>, vector<32x96xf32>, vector<16x96xf32> -> vector<16x96xf32>
    %22 = vector.extract_strided_slice %21 {offsets = [0, 0], sizes = [16, 32], strides = [1, 1]} : vector<16x96xf32> to vector<16x32xf32>
    %23 = vector.extract_strided_slice %21 {offsets = [0, 32], sizes = [16, 32], strides = [1, 1]} : vector<16x96xf32> to vector<16x32xf32>
    %24 = vector.extract_strided_slice %21 {offsets = [0, 64], sizes = [16, 32], strides = [1, 1]} : vector<16x96xf32> to vector<16x32xf32>
    %cst_10 = arith.constant dense<0.000000e+00> : vector<16x16xf32>
    %25 = tpu.matmul %22, %23, %cst_10 {dimension_numbers = #tpu.dot_dimension_numbers<[1], [1], [0], [0], [0, 0, 1, 0], [], []>} : vector<16x32xf32>, vector<16x32xf32>, vector<16x16xf32> -> vector<16x16xf32>
    %c0_11 = arith.constant 0 : index
    %c0_12 = arith.constant 0 : index
    %26 = vector.load %arg1[%c0_11, %c0_12] : memref<16x16xf32, #tpu.memory_space<vmem>>, vector<16x16xf32>
    %27 = arith.addf %25, %26 : vector<16x16xf32>
    %cst_13 = arith.constant dense<0xFF800000> : vector<16xf32>
    %28 = vector.multi_reduction <maximumf>, %27, %cst_13 [1] : vector<16x16xf32> to vector<16xf32>
    %29 = vector.shape_cast %28 : vector<16xf32> to vector<16x1xf32>
    %30 = vector.broadcast %29 : vector<16x1xf32> to vector<16x16xf32>
    %31 = arith.subf %27, %30 : vector<16x16xf32>
    %32 = math.exp %31 : vector<16x16xf32>
    %cst_14 = arith.constant dense<0.000000e+00> : vector<16xf32>
    %33 = vector.multi_reduction <add>, %32, %cst_14 [1] : vector<16x16xf32> to vector<16xf32>
    %34 = vector.shape_cast %33 : vector<16xf32> to vector<16x1xf32>
    %35 = vector.broadcast %34 : vector<16x1xf32> to vector<16x16xf32>
    %36 = arith.divf %32, %35 : vector<16x16xf32>
    %cst_15 = arith.constant dense<0.000000e+00> : vector<16x32xf32>
    %37 = tpu.matmul %36, %24, %cst_15 {dimension_numbers = #tpu.dot_dimension_numbers<[1], [0], [0], [1], [0, 0, 1, 1], [], []>} : vector<16x16xf32>, vector<16x32xf32>, vector<16x32xf32> -> vector<16x32xf32>
    %cst_16 = arith.constant dense<0.000000e+00> : vector<16x32xf32>
    %38 = tpu.matmul %37, %1, %cst_16 {dimension_numbers = #tpu.dot_dimension_numbers<[1], [0], [0], [1], [0, 0, 1, 1], [], []>} : vector<16x32xf32>, vector<32x32xf32>, vector<16x32xf32> -> vector<16x32xf32>
    %39 = arith.addf %20, %38 : vector<16x32xf32>
    %cst_17 = arith.constant dense<0.000000e+00> : vector<16xf32>
    %40 = vector.multi_reduction <add>, %39, %cst_17 [1] : vector<16x32xf32> to vector<16xf32>
    %41 = vector.shape_cast %40 : vector<16xf32> to vector<16x1xf32>
    %cst_18 = arith.constant 3.200000e+01 : f32
    %42 = vector.broadcast %cst_18 : f32 to vector<16x1xf32>
    %43 = arith.divf %41, %42 : vector<16x1xf32>
    %44 = vector.broadcast %43 : vector<16x1xf32> to vector<16x32xf32>
    %45 = arith.subf %39, %44 : vector<16x32xf32>
    %46 = arith.mulf %45, %45 : vector<16x32xf32>
    %cst_19 = arith.constant dense<0.000000e+00> : vector<16xf32>
    %47 = vector.multi_reduction <add>, %46, %cst_19 [1] : vector<16x32xf32> to vector<16xf32>
    %48 = vector.shape_cast %47 : vector<16xf32> to vector<16x1xf32>
    %cst_20 = arith.constant 3.200000e+01 : f32
    %49 = vector.broadcast %cst_20 : f32 to vector<16x1xf32>
    %50 = arith.divf %48, %49 : vector<16x1xf32>
    %51 = vector.broadcast %43 : vector<16x1xf32> to vector<16x32xf32>
    %52 = arith.subf %39, %51 : vector<16x32xf32>
    %cst_21 = arith.constant 9.99999974E-6 : f32
    %53 = vector.broadcast %cst_21 : f32 to vector<16x1xf32>
    %54 = arith.addf %50, %53 : vector<16x1xf32>
    %55 = math.rsqrt %54 : vector<16x1xf32>
    %56 = vector.broadcast %55 : vector<16x1xf32> to vector<16x32xf32>
    %57 = arith.mulf %52, %56 : vector<16x32xf32>
    %58 = vector.broadcast %9 : vector<1x32xf32> to vector<16x32xf32>
    %59 = arith.mulf %57, %58 : vector<16x32xf32>
    %60 = vector.broadcast %10 : vector<1x32xf32> to vector<16x32xf32>
    %61 = arith.addf %59, %60 : vector<16x32xf32>
    %cst_22 = arith.constant dense<0.000000e+00> : vector<16x64xf32>
    %62 = tpu.matmul %61, %2, %cst_22 {dimension_numbers = #tpu.dot_dimension_numbers<[1], [0], [0], [1], [0, 0, 1, 1], [], []>} : vector<16x32xf32>, vector<32x64xf32>, vector<16x64xf32> -> vector<16x64xf32>
    %63 = vector.broadcast %7 : vector<1x64xf32> to vector<16x64xf32>
    %64 = arith.addf %62, %63 : vector<16x64xf32>
    %65 = arith.mulf %64, %64 : vector<16x64xf32>
    %66 = arith.mulf %64, %65 : vector<16x64xf32>
    %cst_23 = arith.constant 4.471500e-02 : f32
    %67 = vector.broadcast %cst_23 : f32 to vector<16x64xf32>
    %68 = arith.mulf %67, %66 : vector<16x64xf32>
    %69 = arith.addf %64, %68 : vector<16x64xf32>
    %cst_24 = arith.constant 0.797884583 : f32
    %70 = vector.broadcast %cst_24 : f32 to vector<16x64xf32>
    %71 = arith.mulf %70, %69 : vector<16x64xf32>
    %72 = math.tanh %71 : vector<16x64xf32>
    %cst_25 = arith.constant 1.000000e+00 : f32
    %73 = vector.broadcast %cst_25 : f32 to vector<16x64xf32>
    %74 = arith.addf %73, %72 : vector<16x64xf32>
    %cst_26 = arith.constant 5.000000e-01 : f32
    %75 = vector.broadcast %cst_26 : f32 to vector<16x64xf32>
    %76 = arith.mulf %75, %74 : vector<16x64xf32>
    %77 = arith.mulf %64, %76 : vector<16x64xf32>
    %cst_27 = arith.constant dense<0.000000e+00> : vector<16x32xf32>
    %78 = tpu.matmul %77, %3, %cst_27 {dimension_numbers = #tpu.dot_dimension_numbers<[1], [0], [0], [1], [0, 0, 1, 1], [], []>} : vector<16x64xf32>, vector<64x32xf32>, vector<16x32xf32> -> vector<16x32xf32>
    %79 = vector.broadcast %8 : vector<1x32xf32> to vector<16x32xf32>
    %80 = arith.addf %78, %79 : vector<16x32xf32>
    %81 = arith.addf %61, %80 : vector<16x32xf32>
    %cst_28 = arith.constant dense<0.000000e+00> : vector<16xf32>
    %82 = vector.multi_reduction <add>, %81, %cst_28 [1] : vector<16x32xf32> to vector<16xf32>
    %83 = vector.shape_cast %82 : vector<16xf32> to vector<16x1xf32>
    %cst_29 = arith.constant 3.200000e+01 : f32
    %84 = vector.broadcast %cst_29 : f32 to vector<16x1xf32>
    %85 = arith.divf %83, %84 : vector<16x1xf32>
    %86 = vector.broadcast %85 : vector<16x1xf32> to vector<16x32xf32>
    %87 = arith.subf %81, %86 : vector<16x32xf32>
    %88 = arith.mulf %87, %87 : vector<16x32xf32>
    %cst_30 = arith.constant dense<0.000000e+00> : vector<16xf32>
    %89 = vector.multi_reduction <add>, %88, %cst_30 [1] : vector<16x32xf32> to vector<16xf32>
    %90 = vector.shape_cast %89 : vector<16xf32> to vector<16x1xf32>
    %cst_31 = arith.constant 3.200000e+01 : f32
    %91 = vector.broadcast %cst_31 : f32 to vector<16x1xf32>
    %92 = arith.divf %90, %91 : vector<16x1xf32>
    %93 = vector.broadcast %85 : vector<16x1xf32> to vector<16x32xf32>
    %94 = arith.subf %81, %93 : vector<16x32xf32>
    %cst_32 = arith.constant 9.99999974E-6 : f32
    %95 = vector.broadcast %cst_32 : f32 to vector<16x1xf32>
    %96 = arith.addf %92, %95 : vector<16x1xf32>
    %97 = math.rsqrt %96 : vector<16x1xf32>
    %98 = vector.broadcast %97 : vector<16x1xf32> to vector<16x32xf32>
    %99 = arith.mulf %94, %98 : vector<16x32xf32>
    %100 = vector.broadcast %11 : vector<1x32xf32> to vector<16x32xf32>
    %101 = arith.mulf %99, %100 : vector<16x32xf32>
    %102 = vector.broadcast %12 : vector<1x32xf32> to vector<16x32xf32>
    %103 = arith.addf %101, %102 : vector<16x32xf32>
    %104 = vector.extract_strided_slice %103 {offsets = [0, 0], sizes = [1, 32], strides = [1, 1]} : vector<16x32xf32> to vector<1x32xf32>
    %105 = vector.shape_cast %104 : vector<1x32xf32> to vector<1x32xf32>
    %106 = vector.broadcast %105 : vector<1x32xf32> to vector<16x32xf32>
    %107 = vector.extract_strided_slice %103 {offsets = [8, 0], sizes = [1, 32], strides = [1, 1]} : vector<16x32xf32> to vector<1x32xf32>
    %108 = vector.shape_cast %107 : vector<1x32xf32> to vector<1x32xf32>
    %109 = vector.broadcast %108 : vector<1x32xf32> to vector<16x32xf32>
    %110 = tpu.concatenate %106, %109 in 0 : vector<16x32xf32>, vector<16x32xf32> -> vector<32x32xf32>
    %c160 = arith.constant 160 : index
    %c0_33 = arith.constant 0 : index
    %111 = vector.load %arg3[%c160, %c0_33] : memref<384x96xf32, #tpu.memory_space<vmem>>, vector<32x32xf32>
    %c192 = arith.constant 192 : index
    %c0_34 = arith.constant 0 : index
    %112 = vector.load %arg3[%c192, %c0_34] : memref<384x96xf32, #tpu.memory_space<vmem>>, vector<32x32xf32>
    %c352 = arith.constant 352 : index
    %c0_35 = arith.constant 0 : index
    %113 = vector.load %arg3[%c352, %c0_35] : memref<384x96xf32, #tpu.memory_space<vmem>>, vector<32x4xf32>
    %114 = arith.mulf %110, %111 : vector<32x32xf32>
    %cst_36 = arith.constant dense<0.000000e+00> : vector<32xf32>
    %115 = vector.multi_reduction <add>, %114, %cst_36 [1] : vector<32x32xf32> to vector<32xf32>
    %116 = vector.shape_cast %115 : vector<32xf32> to vector<32x1xf32>
    %117 = vector.extract_strided_slice %113 {offsets = [0, 0], sizes = [32, 1], strides = [1, 1]} : vector<32x4xf32> to vector<32x1xf32>
    %118 = arith.addf %116, %117 : vector<32x1xf32>
    %119 = arith.mulf %110, %112 : vector<32x32xf32>
    %cst_37 = arith.constant dense<0.000000e+00> : vector<32xf32>
    %120 = vector.multi_reduction <add>, %119, %cst_37 [1] : vector<32x32xf32> to vector<32xf32>
    %121 = vector.shape_cast %120 : vector<32xf32> to vector<32x1xf32>
    %122 = vector.extract_strided_slice %113 {offsets = [0, 1], sizes = [32, 1], strides = [1, 1]} : vector<32x4xf32> to vector<32x1xf32>
    %123 = arith.addf %121, %122 : vector<32x1xf32>
    %c224 = arith.constant 224 : index
    %c0_38 = arith.constant 0 : index
    %124 = vector.load %arg3[%c224, %c0_38] : memref<384x96xf32, #tpu.memory_space<vmem>>, vector<32x8xf32>
    %c256 = arith.constant 256 : index
    %c0_39 = arith.constant 0 : index
    %125 = vector.load %arg3[%c256, %c0_39] : memref<384x96xf32, #tpu.memory_space<vmem>>, vector<8x32xf32>
    %c0_40 = arith.constant 0 : index
    %c0_41 = arith.constant 0 : index
    %126 = vector.load %arg2[%c0_40, %c0_41] : memref<8x256xf32, #tpu.memory_space<vmem>>, vector<8x256xf32>
    %cst_42 = arith.constant dense<0.000000e+00> : vector<32x256xf32>
    %127 = tpu.matmul %124, %126, %cst_42 {dimension_numbers = #tpu.dot_dimension_numbers<[1], [0], [0], [1], [0, 0, 1, 1], [], []>} : vector<32x8xf32>, vector<8x256xf32>, vector<32x256xf32> -> vector<32x256xf32>
    %128 = vector.extract_strided_slice %113 {offsets = [0, 2], sizes = [32, 1], strides = [1, 1]} : vector<32x4xf32> to vector<32x1xf32>
    %129 = vector.broadcast %128 : vector<32x1xf32> to vector<32x256xf32>
    %130 = arith.addf %127, %129 : vector<32x256xf32>
    %cst_43 = arith.constant 1.000000e+00 : f32
    %131 = vector.broadcast %cst_43 : f32 to vector<32x1xf32>
    %132 = arith.addf %131, %118 : vector<32x1xf32>
    %133 = vector.broadcast %132 : vector<32x1xf32> to vector<32x256xf32>
    %134 = arith.mulf %130, %133 : vector<32x256xf32>
    %135 = vector.broadcast %123 : vector<32x1xf32> to vector<32x256xf32>
    %136 = arith.addf %134, %135 : vector<32x256xf32>
    %cst_44 = arith.constant 0.000000e+00 : f32
    %137 = vector.broadcast %cst_44 : f32 to vector<32x256xf32>
    %138 = arith.maximumf %136, %137 : vector<32x256xf32>
    %cst_45 = arith.constant dense<0.000000e+00> : vector<8x256xf32>
    %139 = tpu.matmul %125, %138, %cst_45 {dimension_numbers = #tpu.dot_dimension_numbers<[1], [0], [0], [1], [0, 0, 1, 1], [], []>} : vector<8x32xf32>, vector<32x256xf32>, vector<8x256xf32> -> vector<8x256xf32>
    %140 = vector.extract_strided_slice %113 {offsets = [0, 3], sizes = [8, 1], strides = [1, 1]} : vector<32x4xf32> to vector<8x1xf32>
    %141 = vector.broadcast %140 : vector<8x1xf32> to vector<8x256xf32>
    %142 = arith.addf %139, %141 : vector<8x256xf32>
    %c0_46 = arith.constant 0 : index
    %c0_47 = arith.constant 0 : index
    %143 = vector.load %arg4[%c0_46, %c0_47] : memref<8x256xf32, #tpu.memory_space<vmem>>, vector<8x256xf32>
    tpu.vector_store %arg4[%c0_46, %c0_47], %142 {strides = array<i32>} : memref<8x256xf32, #tpu.memory_space<vmem>>, vector<8x256xf32>,
    return
  }
}

</mosaic_0001>

<llo_original>
// kernel: model_forward.1
$region0: #{model_forward.1}
  #allocation0 [shape = 'u32[]', space=smem, size = 0x4, offset = 0x4, fixed_abs, tag = 'smem constant byte address 0x4 - core index']
  #allocation1 [shape = 'u32[144,128]{1,0:T(1,128)}', space=vmem, size = 0x12000, scoped, tag = 'internal scratch']
  %s0 = inlined_call_operand.vmem [shape: s32[16,1], index: 0, kind: input, shape index: {}]
  %s1 = inlined_call_operand.vmem [shape: f32[16,16], index: 1, kind: input, shape index: {}]
  %s2 = inlined_call_operand.vmem [shape: f32[8,256], index: 2, kind: input, shape index: {}]
  %s3 = inlined_call_operand.vmem [shape: f32[384,96], index: 3, kind: input, shape index: {}]
  %s4 = inlined_call_operand.vmem [shape: f32[8,256], index: 4, kind: output, shape index: {}]
  %s5 = sld [smem:[#allocation0]]
  $region26: #{model_forward.1} parent=0
    _
  %s7 = ssub.s32 1, %s5
  %s8 = scalar_select 0, %s7, %s5
  // Predicated region
  $region2: #{model_forward.1} parent=0 // pred_check
    _
  $region3: #{model_forward.1} parent=0 // pred_check_branch
    %10 = sbr.rel (0) target = $region5
  $region4: #{model_forward.1} parent=0 // pred_region
    _
  $region5: #{model_forward.1} parent=0 // pred_fallthru
    _
  // Predicated region
  $region6: #{model_forward.1} parent=0 // pred_check
    _
  $region7: #{model_forward.1} parent=0 // pred_check_branch
    %12 = sbr.rel (0) target = $region9
  $region8: #{model_forward.1} parent=0 // pred_region
    _
  $region9: #{model_forward.1} parent=0 // pred_fallthru
    _
  // Predicated region
  $region10: #{model_forward.1} parent=0 // pred_check
    _
  $region11: #{model_forward.1} parent=0 // pred_check_branch
    %14 = sbr.rel (0) target = $region13
  $region12: #{model_forward.1} parent=0 // pred_region
    _
  $region13: #{model_forward.1} parent=0 // pred_fallthru
    _
  // Predicated region
  $region14: #{model_forward.1} parent=0 // pred_check
    _
  $region15: #{model_forward.1} parent=0 // pred_check_branch
    %16 = sbr.rel (0) target = $region17
  $region16: #{model_forward.1} parent=0 // pred_region
    _
  $region17: #{model_forward.1} parent=0 // pred_fallthru
    _
  %v17 = vld [vmem:[%s3] sm:$0xff]
  %v18 = vld [vmem:[%s3 + $0x8] sm:$0xff]
  %v19 = vld [vmem:[%s3 + $0x10] sm:$0xff]
  %v20 = vld [vmem:[%s3 + $0x18] sm:$0xff]
  %v21 = vld [vmem:[%s3 + $0x20] sm:$0xff]
  %v22 = vld [vmem:[%s3 + $0x28] sm:$0xff]
  %v23 = vld [vmem:[%s3 + $0x30] sm:$0xff]
  %v24 = vld [vmem:[%s3 + $0x38] sm:$0xff]
  %v25 = vld [vmem:[%s3 + $0x40] sm:$0xff]
  %v26 = vld [vmem:[%s3 + $0x48] sm:$0xff]
  %v27 = vld [vmem:[%s3 + $0x50] sm:$0xff]
  %v28 = vld [vmem:[%s3 + $0x58] sm:$0xff]
  %v29 = vld [vmem:[%s3 + $0x60] sm:$0xff]
  %v30 = vld [vmem:[%s3 + $0x68] sm:$0xff]
  %v31 = vld [vmem:[%s3 + $0x70] sm:$0xff]
  %v32 = vld [vmem:[%s3 + $0x78] sm:$0xff]
  %v33 = vld [vmem:[%s3 + $0x80] sm:$0xff]
  %v34 = vld [vmem:[%s3 + $0x88] sm:$0xff]
  %v35 = vld [vmem:[%s3 + $0x90] sm:$0xff]
  %v36 = vld [vmem:[%s3 + $0x98] sm:$0xff]
  %v37 = vld [vmem:[%s3 + $0x108] sm:$0xff]
  %v38 = vld [vmem:[%s3 + $0x110] sm:$0xff]
  %v39 = vld [vmem:[%s3 + $0x118] sm:$0xff]
  %v40 = vld [vmem:[%s3 + $0x120] sm:$0xff]
  %v41 = vld [vmem:[%s3 + $0x128] sm:$0xff]
  %v42 = vld [vmem:[%s3 + $0x130] sm:$0xff]
  %v43 = vld [vmem:[%s3 + $0x138] sm:$0xff]
  %v44 = vld [vmem:[%s3 + $0x140] sm:$0xff]
  %v45 = vld [vmem:[%s3 + $0x148] sm:$0xff]
  %v46 = vld [vmem:[%s3 + $0x150] sm:$0xff]
  %v47 = vld [vmem:[%s3 + $0x158] sm:$0xff]
  %v48 = vld [vmem:[%s0] sm:$0xff]
  %v49 = vld [vmem:[%s0 + $0x8] sm:$0xff]
  %v50 = vlaneseq
  %v51 = vand.u32 %v50, 127
  %52 = vset.pattern.permute.xlu0 0
  %53 = vperm.xlu0 %52, %v48
  %v54 = vpop.permute.xlu0 %53
  %55 = vset.pattern.permute.xlu0 0
  %56 = vperm.xlu0 %55, %v49
  %v57 = vpop.permute.xlu0 %56
  %vm58 = vcmp.eq.s32.totalorder %v51, %v54
  %vm59 = vcmp.eq.s32.totalorder %v51, %v57
  %v60 = vsel %vm58, 1, 0
  %v61 = vsel %vm59, 1, 0
  %v62 = vcvt.s32.f32 %v60
  %v63 = vcvt.s32.f32 %v61
  %vm64 = vcmask 523264
  %v66 = vsel %vm64, %v62, 0
  %v69 = vsel %vm64, %v63, 0
  %71 = vmatprep.subr.mxu0 0.0
  %72 = vmatpush1.msra.mxu0 %v37
  %73 = vmatprep.subr.mxu0 0.0
  %74 = vmatpush1.msra.mxu0 %v38
  %75 = vmatprep.subr.mxu0 0.0
  %76 = vmatpush1.msra.mxu0 %v39
  %77 = vmatprep.subr.mxu0 0.0
  %78 = vmatpush1.msra.mxu0 %v40
  %79 = vmatprep.subr.mxu0 0.0
  %80 = vmatpush1.msra.mxu0 %v41
  %81 = vmatprep.subr.mxu0 0.0
  %82 = vmatpush1.msra.mxu0 %v42
  %83 = vmatprep.subr.mxu0 0.0
  %84 = vmatpush1.msra.mxu0 %v43
  %85 = vmatprep.subr.mxu0 0.0
  %86 = vmatpush1.msra.mxu0 %v44
  %87 = vmatprep.subr.mxu0 0.0
  %88 = vmatpush1.msra.mxu0 0.0
  %89 = vmatprep.subr.mxu0 0.0
  %90 = vmatpush1.msra.mxu0 0.0
  %91 = vmatprep.subr.mxu0 0.0
  %92 = vmatpush1.msra.mxu0 0.0
  %93 = vmatprep.subr.mxu0 0.0
  %94 = vmatpush1.msra.mxu0 0.0
  %95 = vmatprep.subr.mxu0 0.0
  %96 = vmatpush1.msra.mxu0 0.0
  %97 = vmatprep.subr.mxu0 0.0
  %98 = vmatpush1.msra.mxu0 0.0
  %99 = vmatprep.subr.mxu0 0.0
  %100 = vmatpush1.msra.mxu0 0.0
  %101 = vmatprep.subr.mxu0 0.0
  %102 = vmatpush1.msra.mxu0 0.0
  %103 = vmatprep.subr.mxu0 0.0
  %104 = vmatpush1.msra.mxu0 0.0
  %105 = vmatprep.subr.mxu0 0.0
  %106 = vmatpush1.msra.mxu0 0.0
  %107 = vmatprep.subr.mxu0 0.0
  %108 = vmatpush1.msra.mxu0 0.0
  %109 = vmatprep.subr.mxu0 0.0
  %110 = vmatpush1.msra.mxu0 0.0
  %111 = vmatprep.subr.mxu0 0.0
  %112 = vmatpush1.msra.mxu0 0.0
  %113 = vmatprep.subr.mxu0 0.0
  %114 = vmatpush1.msra.mxu0 0.0
  %115 = vmatprep.subr.mxu0 0.0
  %116 = vmatpush1.msra.mxu0 0.0
  %117 = vmatprep.subr.mxu0 0.0
  %118 = vmatpush1.msra.mxu0 0.0
  %119 = vmatprep.subr.mxu0 0.0
  %120 = vmatpush1.msra.mxu0 0.0
  %121 = vmatprep.subr.mxu0 0.0
  %122 = vmatpush1.msra.mxu0 0.0
  %123 = vmatprep.subr.mxu0 0.0
  %124 = vmatpush1.msra.mxu0 0.0
  %125 = vmatprep.subr.mxu0 0.0
  %126 = vmatpush1.msra.mxu0 0.0
  %127 = vmatprep.subr.mxu0 0.0
  %128 = vmatpush1.msra.mxu0 0.0
  %129 = vmatprep.subr.mxu0 0.0
  %130 = vmatpush1.msra.mxu0 0.0
  %131 = vmatprep.subr.mxu0 0.0
  %132 = vmatpush1.msra.mxu0 0.0
  %133 = vmatprep.subr.mxu0 0.0
  %134 = vmatpush1.msra.mxu0 0.0
  %135 = vmatprep.mubr.f32.mxu0 0.0
  %136 = vmatmul.mubr.f32.gmra.mrb[0].mxu0 %v66
  %v137 = vpop.f32.mrb[0].mxu0
  %v138 = vadd.f32 %v45, %v137
  %v139 = vpop.f32.mrb[0].mxu0
  %140 = vmatprep.mubr.f32.mxu0 0.0
  %141 = vmatmul.mubr.f32.gmra.mrb[0].mxu0 %v69
  %v142 = vpop.f32.mrb[0].mxu0
  %v143 = vadd.f32 %v46, %v142
  %v144 = vpop.f32.mrb[0].mxu0
  %145 = vdwg.mxu0
  %vm146 = vcmask 261120
  %v148 = vsel %vm146, %v138, 0
  %v151 = vsel %vm146, %v143, 0
  %153 = vmatprep.subr.mxu0 0.0
  %154 = vmatpush1.msra.mxu0 %v17
  %155 = vmatprep.subr.mxu0 0.0
  %156 = vmatpush1.msra.mxu0 %v18
  %157 = vmatprep.subr.mxu0 0.0
  %158 = vmatpush1.msra.mxu0 %v19
  %159 = vmatprep.subr.mxu0 0.0
  %160 = vmatpush1.msra.mxu0 %v20
  %161 = vmatprep.subr.mxu0 0.0
  %162 = vmatpush1.msra.mxu0 0.0
  %163 = vmatprep.subr.mxu0 0.0
  %164 = vmatpush1.msra.mxu0 0.0
  %165 = vmatprep.subr.mxu0 0.0
  %166 = vmatpush1.msra.mxu0 0.0
  %167 = vmatprep.subr.mxu0 0.0
  %168 = vmatpush1.msra.mxu0 0.0
  %169 = vmatprep.subr.mxu0 0.0
  %170 = vmatpush1.msra.mxu0 0.0
  %171 = vmatprep.subr.mxu0 0.0
  %172 = vmatpush1.msra.mxu0 0.0
  %173 = vmatprep.subr.mxu0 0.0
  %174 = vmatpush1.msra.mxu0 0.0
  %175 = vmatprep.subr.mxu0 0.0
  %176 = vmatpush1.msra.mxu0 0.0
  %177 = vmatprep.subr.mxu0 0.0
  %178 = vmatpush1.msra.mxu0 0.0
  %179 = vmatprep.subr.mxu0 0.0
  %180 = vmatpush1.msra.mxu0 0.0
  %181 = vmatprep.subr.mxu0 0.0
  %182 = vmatpush1.msra.mxu0 0.0
  %183 = vmatprep.subr.mxu0 0.0
  %184 = vmatpush1.msra.mxu0 0.0
  %185 = vmatprep.subr.mxu0 0.0
  %186 = vmatpush1.msra.mxu0 0.0
  %187 = vmatprep.subr.mxu0 0.0
  %188 = vmatpush1.msra.mxu0 0.0
  %189 = vmatprep.subr.mxu0 0.0
  %190 = vmatpush1.msra.mxu0 0.0
  %191 = vmatprep.subr.mxu0 0.0
  %192 = vmatpush1.msra.mxu0 0.0
  %193 = vmatprep.subr.mxu0 0.0
  %194 = vmatpush1.msra.mxu0 0.0
  %195 = vmatprep.subr.mxu0 0.0
  %196 = vmatpush1.msra.mxu0 0.0
  %197 = vmatprep.subr.mxu0 0.0
  %198 = vmatpush1.msra.mxu0 0.0
  %199 = vmatprep.subr.mxu0 0.0
  %200 = vmatpush1.msra.mxu0 0.0
  %201 = vmatprep.subr.mxu0 0.0
  %202 = vmatpush1.msra.mxu0 0.0
  %203 = vmatprep.subr.mxu0 0.0
  %204 = vmatpush1.msra.mxu0 0.0
  %205 = vmatprep.subr.mxu0 0.0
  %206 = vmatpush1.msra.mxu0 0.0
  %207 = vmatprep.subr.mxu0 0.0
  %208 = vmatpush1.msra.mxu0 0.0
  %209 = vmatprep.subr.mxu0 0.0
  %210 = vmatpush1.msra.mxu0 0.0
  %211 = vmatprep.subr.mxu0 0.0
  %212 = vmatpush1.msra.mxu0 0.0
  %213 = vmatprep.subr.mxu0 0.0
  %214 = vmatpush1.msra.mxu0 0.0
  %215 = vmatprep.subr.mxu0 0.0
  %216 = vmatpush1.msra.mxu0 0.0
  %217 = vmatprep.mubr.f32.mxu0 0.0
  %218 = vmatmul.mubr.f32.gmra.mrb[0].mxu0 %v148
  %v219 = vpop.f32.mrb[0].mxu0
  %v220 = vadd.f32 0.0, %v219
  %v221 = vpop.f32.mrb[0].mxu0
  %222 = vmatprep.mubr.f32.mxu0 0.0
  %223 = vmatmul.mubr.f32.gmra.mrb[0].mxu0 %v151
  %v224 = vpop.f32.mrb[0].mxu0
  %v225 = vadd.f32 0.0, %v224
  %v226 = vpop.f32.mrb[0].mxu0
  %227 = vdwg.mxu0
  %v228 = vld [vmem:[%s1] sm:$0xff]
  %v229 = vld [vmem:[%s1 + $0x8] sm:$0xff]
  %232 = vrot.lane.b32.xlu0 %v220, 96
  %v233 = vpop.permute.xlu0 %232
  %234 = vrot.lane.b32.xlu0 %v225, 96
  %v235 = vpop.permute.xlu0 %234
  %v236 = vsel %vm146, %v220, 0
  %v238 = vsel %vm146, %v225, 0
  %v240 = vsel %vm146, %v233, 0
  %v242 = vsel %vm146, %v235, 0
  %244 = vmatprep.subr.mxu0 0.0
  %245 = vmatpush1.xpose.msra.mxu0 %v240
  %246 = vmatprep.subr.mxu0 0.0
  %247 = vmatpush1.xpose.msra.mxu0 %v242
  %248 = vmatprep.subr.mxu0 0.0
  %249 = vmatpush1.xpose.msra.mxu0 0.0
  %250 = vmatprep.subr.mxu0 0.0
  %251 = vmatpush1.xpose.msra.mxu0 0.0
  %252 = vmatprep.subr.mxu0 0.0
  %253 = vmatpush1.xpose.msra.mxu0 0.0
  %254 = vmatprep.subr.mxu0 0.0
  %255 = vmatpush1.xpose.msra.mxu0 0.0
  %256 = vmatprep.subr.mxu0 0.0
  %257 = vmatpush1.xpose.msra.mxu0 0.0
  %258 = vmatprep.subr.mxu0 0.0
  %259 = vmatpush1.xpose.msra.mxu0 0.0
  %260 = vmatprep.subr.mxu0 0.0
  %261 = vmatpush1.xpose.msra.mxu0 0.0
  %262 = vmatprep.subr.mxu0 0.0
  %263 = vmatpush1.xpose.msra.mxu0 0.0
  %264 = vmatprep.subr.mxu0 0.0
  %265 = vmatpush1.xpose.msra.mxu0 0.0
  %266 = vmatprep.subr.mxu0 0.0
  %267 = vmatpush1.xpose.msra.mxu0 0.0
  %268 = vmatprep.subr.mxu0 0.0
  %269 = vmatpush1.xpose.msra.mxu0 0.0
  %270 = vmatprep.subr.mxu0 0.0
  %271 = vmatpush1.xpose.msra.mxu0 0.0
  %272 = vmatprep.subr.mxu0 0.0
  %273 = vmatpush1.xpose.msra.mxu0 0.0
  %274 = vmatprep.subr.mxu0 0.0
  %275 = vmatpush1.xpose.msra.mxu0 0.0
  %276 = vmatprep.subr.mxu0 0.0
  %277 = vmatpush1.xpose.msra.mxu0 0.0
  %278 = vmatprep.subr.mxu0 0.0
  %279 = vmatpush1.xpose.msra.mxu0 0.0
  %280 = vmatprep.subr.mxu0 0.0
  %281 = vmatpush1.xpose.msra.mxu0 0.0
  %282 = vmatprep.subr.mxu0 0.0
  %283 = vmatpush1.xpose.msra.mxu0 0.0
  %284 = vmatprep.subr.mxu0 0.0
  %285 = vmatpush1.xpose.msra.mxu0 0.0
  %286 = vmatprep.subr.mxu0 0.0
  %287 = vmatpush1.xpose.msra.mxu0 0.0
  %288 = vmatprep.subr.mxu0 0.0
  %289 = vmatpush1.xpose.msra.mxu0 0.0
  %290 = vmatprep.subr.mxu0 0.0
  %291 = vmatpush1.xpose.msra.mxu0 0.0
  %292 = vmatprep.subr.mxu0 0.0
  %293 = vmatpush1.xpose.msra.mxu0 0.0
  %294 = vmatprep.subr.mxu0 0.0
  %295 = vmatpush1.xpose.msra.mxu0 0.0
  %296 = vmatprep.subr.mxu0 0.0
  %297 = vmatpush1.xpose.msra.mxu0 0.0
  %298 = vmatprep.subr.mxu0 0.0
  %299 = vmatpush1.xpose.msra.mxu0 0.0
  %300 = vmatprep.subr.mxu0 0.0
  %301 = vmatpush1.xpose.msra.mxu0 0.0
  %302 = vmatprep.subr.mxu0 0.0
  %303 = vmatpush1.xpose.msra.mxu0 0.0
  %304 = vmatprep.subr.mxu0 0.0
  %305 = vmatpush1.xpose.msra.mxu0 0.0
  %306 = vmatprep.subr.mxu0 0.0
  %307 = vmatpush1.xpose.msra.mxu0 0.0
  %308 = vmatprep.mubr.f32.mxu0 0.0
  %309 = vmatmul.mubr.f32.gmra.mrb[0].mxu0 %v236
  %v310 = vpop.f32.mrb[0].mxu0
  %v311 = vadd.f32 %v228, %v310
  %v312 = vpop.f32.mrb[0].mxu0
  %313 = vmatprep.mubr.f32.mxu0 0.0
  %314 = vmatmul.mubr.f32.gmra.mrb[0].mxu0 %v238
  %v315 = vpop.f32.mrb[0].mxu0
  %v316 = vadd.f32 %v229, %v315
  %v317 = vpop.f32.mrb[0].mxu0
  %318 = vdwg.mxu0
  %vm319 = vcmask 130048
  %v320 = vsel %vm319, %v311, -inf
  %321 = vmax.xlane.f32.xlu0 %v320
  %v322 = vpop.xlane.xlu0 %321
  %v323 = vsel %vm319, %v316, -inf
  %324 = vmax.xlane.f32.xlu0 %v323
  %v325 = vpop.xlane.xlu0 %324
  %v326 = vsub.f32 %v311, %v322
  %v327 = vsub.f32 %v316, %v325
  %v328 = vmul.f32 %v326, 1.442695
  %v329 = vpow.pop %v328
  %v330 = vmul.f32 %v327, 1.442695
  %v331 = vpow.pop %v330
  %v332 = vsel %vm319, %v329, 0.0
  %333 = vadd.xlane.f32.xlu0 %v332
  %v334 = vpop.xlane.xlu0 %333
  %v335 = vsel %vm319, %v331, 0.0
  %336 = vadd.xlane.f32.xlu0 %v335
  %v337 = vpop.xlane.xlu0 %336
  %v338 = vrcp.pop %v334
  %v339 = vmul.f32 %v329, %v338
  %v340 = vrcp.pop %v337
  %v341 = vmul.f32 %v331, %v340
  %342 = vrot.lane.b32.xlu0 %v220, 64
  %v343 = vpop.permute.xlu0 %342
  %344 = vrot.lane.b32.xlu0 %v225, 64
  %v345 = vpop.permute.xlu0 %344
  %v349 = vsel %vm319, %v339, 0
  %v352 = vsel %vm319, %v341, 0
  %354 = vmatprep.subr.mxu0 0.0
  %355 = vmatpush1.msra.mxu0 %v343
  %356 = vmatprep.subr.mxu0 0.0
  %357 = vmatpush1.msra.mxu0 %v345
  %358 = vmatprep.subr.mxu0 0.0
  %359 = vmatpush1.msra.mxu0 0.0
  %360 = vmatprep.subr.mxu0 0.0
  %361 = vmatpush1.msra.mxu0 0.0
  %362 = vmatprep.subr.mxu0 0.0
  %363 = vmatpush1.msra.mxu0 0.0
  %364 = vmatprep.subr.mxu0 0.0
  %365 = vmatpush1.msra.mxu0 0.0
  %366 = vmatprep.subr.mxu0 0.0
  %367 = vmatpush1.msra.mxu0 0.0
  %368 = vmatprep.subr.mxu0 0.0
  %369 = vmatpush1.msra.mxu0 0.0
  %370 = vmatprep.subr.mxu0 0.0
  %371 = vmatpush1.msra.mxu0 0.0
  %372 = vmatprep.subr.mxu0 0.0
  %373 = vmatpush1.msra.mxu0 0.0
  %374 = vmatprep.subr.mxu0 0.0
  %375 = vmatpush1.msra.mxu0 0.0
  %376 = vmatprep.subr.mxu0 0.0
  %377 = vmatpush1.msra.mxu0 0.0
  %378 = vmatprep.subr.mxu0 0.0
  %379 = vmatpush1.msra.mxu0 0.0
  %380 = vmatprep.subr.mxu0 0.0
  %381 = vmatpush1.msra.mxu0 0.0
  %382 = vmatprep.subr.mxu0 0.0
  %383 = vmatpush1.msra.mxu0 0.0
  %384 = vmatprep.subr.mxu0 0.0
  %385 = vmatpush1.msra.mxu0 0.0
  %386 = vmatprep.subr.mxu0 0.0
  %387 = vmatpush1.msra.mxu0 0.0
  %388 = vmatprep.subr.mxu0 0.0
  %389 = vmatpush1.msra.mxu0 0.0
  %390 = vmatprep.subr.mxu0 0.0
  %391 = vmatpush1.msra.mxu0 0.0
  %392 = vmatprep.subr.mxu0 0.0
  %393 = vmatpush1.msra.mxu0 0.0
  %394 = vmatprep.subr.mxu0 0.0
  %395 = vmatpush1.msra.mxu0 0.0
  %396 = vmatprep.subr.mxu0 0.0
  %397 = vmatpush1.msra.mxu0 0.0
  %398 = vmatprep.subr.mxu0 0.0
  %399 = vmatpush1.msra.mxu0 0.0
  %400 = vmatprep.subr.mxu0 0.0
  %401 = vmatpush1.msra.mxu0 0.0
  %402 = vmatprep.subr.mxu0 0.0
  %403 = vmatpush1.msra.mxu0 0.0
  %404 = vmatprep.subr.mxu0 0.0
  %405 = vmatpush1.msra.mxu0 0.0
  %406 = vmatprep.subr.mxu0 0.0
  %407 = vmatpush1.msra.mxu0 0.0
  %408 = vmatprep.subr.mxu0 0.0
  %409 = vmatpush1.msra.mxu0 0.0
  %410 = vmatprep.subr.mxu0 0.0
  %411 = vmatpush1.msra.mxu0 0.0
  %412 = vmatprep.subr.mxu0 0.0
  %413 = vmatpush1.msra.mxu0 0.0
  %414 = vmatprep.subr.mxu0 0.0
  %415 = vmatpush1.msra.mxu0 0.0
  %416 = vmatprep.subr.mxu0 0.0
  %417 = vmatpush1.msra.mxu0 0.0
  %418 = vmatprep.mubr.f32.mxu0 0.0
  %419 = vmatmul.mubr.f32.gmra.mrb[0].mxu0 %v349
  %v420 = vpop.f32.mrb[0].mxu0
  %v421 = vadd.f32 0.0, %v420
  %v422 = vpop.f32.mrb[0].mxu0
  %423 = vmatprep.mubr.f32.mxu0 0.0
  %424 = vmatmul.mubr.f32.gmra.mrb[0].mxu0 %v352
  %v425 = vpop.f32.mrb[0].mxu0
  %v426 = vadd.f32 0.0, %v425
  %v427 = vpop.f32.mrb[0].mxu0
  %428 = vdwg.mxu0
  %v430 = vsel %vm146, %v421, 0
  %v433 = vsel %vm146, %v426, 0
  %435 = vmatprep.subr.mxu0 0.0
  %436 = vmatpush1.msra.mxu0 %v21
  %437 = vmatprep.subr.mxu0 0.0
  %438 = vmatpush1.msra.mxu0 %v22
  %439 = vmatprep.subr.mxu0 0.0
  %440 = vmatpush1.msra.mxu0 %v23
  %441 = vmatprep.subr.mxu0 0.0
  %442 = vmatpush1.msra.mxu0 %v24
  %443 = vmatprep.subr.mxu0 0.0
  %444 = vmatpush1.msra.mxu0 0.0
  %445 = vmatprep.subr.mxu0 0.0
  %446 = vmatpush1.msra.mxu0 0.0
  %447 = vmatprep.subr.mxu0 0.0
  %448 = vmatpush1.msra.mxu0 0.0
  %449 = vmatprep.subr.mxu0 0.0
  %450 = vmatpush1.msra.mxu0 0.0
  %451 = vmatprep.subr.mxu0 0.0
  %452 = vmatpush1.msra.mxu0 0.0
  %453 = vmatprep.subr.mxu0 0.0
  %454 = vmatpush1.msra.mxu0 0.0
  %455 = vmatprep.subr.mxu0 0.0
  %456 = vmatpush1.msra.mxu0 0.0
  %457 = vmatprep.subr.mxu0 0.0
  %458 = vmatpush1.msra.mxu0 0.0
  %459 = vmatprep.subr.mxu0 0.0
  %460 = vmatpush1.msra.mxu0 0.0
  %461 = vmatprep.subr.mxu0 0.0
  %462 = vmatpush1.msra.mxu0 0.0
  %463 = vmatprep.subr.mxu0 0.0
  %464 = vmatpush1.msra.mxu0 0.0
  %465 = vmatprep.subr.mxu0 0.0
  %466 = vmatpush1.msra.mxu0 0.0
  %467 = vmatprep.subr.mxu0 0.0
  %468 = vmatpush1.msra.mxu0 0.0
  %469 = vmatprep.subr.mxu0 0.0
  %470 = vmatpush1.msra.mxu0 0.0
  %471 = vmatprep.subr.mxu0 0.0
  %472 = vmatpush1.msra.mxu0 0.0
  %473 = vmatprep.subr.mxu0 0.0
  %474 = vmatpush1.msra.mxu0 0.0
  %475 = vmatprep.subr.mxu0 0.0
  %476 = vmatpush1.msra.mxu0 0.0
  %477 = vmatprep.subr.mxu0 0.0
  %478 = vmatpush1.msra.mxu0 0.0
  %479 = vmatprep.subr.mxu0 0.0
  %480 = vmatpush1.msra.mxu0 0.0
  %481 = vmatprep.subr.mxu0 0.0
  %482 = vmatpush1.msra.mxu0 0.0
  %483 = vmatprep.subr.mxu0 0.0
  %484 = vmatpush1.msra.mxu0 0.0
  %485 = vmatprep.subr.mxu0 0.0
  %486 = vmatpush1.msra.mxu0 0.0
  %487 = vmatprep.subr.mxu0 0.0
  %488 = vmatpush1.msra.mxu0 0.0
  %489 = vmatprep.subr.mxu0 0.0
  %490 = vmatpush1.msra.mxu0 0.0
  %491 = vmatprep.subr.mxu0 0.0
  %492 = vmatpush1.msra.mxu0 0.0
  %493 = vmatprep.subr.mxu0 0.0
  %494 = vmatpush1.msra.mxu0 0.0
  %495 = vmatprep.subr.mxu0 0.0
  %496 = vmatpush1.msra.mxu0 0.0
  %497 = vmatprep.subr.mxu0 0.0
  %498 = vmatpush1.msra.mxu0 0.0
  %499 = vmatprep.mubr.f32.mxu0 0.0
  %500 = vmatmul.mubr.f32.gmra.mrb[0].mxu0 %v430
  %v501 = vpop.f32.mrb[0].mxu0
  %v502 = vadd.f32 0.0, %v501
  %v503 = vpop.f32.mrb[0].mxu0
  %504 = vmatprep.mubr.f32.mxu0 0.0
  %505 = vmatmul.mubr.f32.gmra.mrb[0].mxu0 %v433
  %v506 = vpop.f32.mrb[0].mxu0
  %v507 = vadd.f32 0.0, %v506
  %v508 = vpop.f32.mrb[0].mxu0
  %509 = vdwg.mxu0
  %v510 = vadd.f32 %v138, %v502
  %v511 = vadd.f32 %v143, %v507
  %v512 = vsel %vm146, %v510, 0.0
  %513 = vadd.xlane.f32.xlu0 %v512
  %v514 = vpop.xlane.xlu0 %513
  %v515 = vsel %vm146, %v511, 0.0
  %516 = vadd.xlane.f32.xlu0 %v515
  %v517 = vpop.xlane.xlu0 %516
  %v518 = vrcp.pop 32.0
  %v519 = vmul.f32 %v514, %v518
  %v520 = vmul.f32 %v517, %v518
  %v521 = vsub.f32 %v510, %v519
  %v522 = vsub.f32 %v511, %v520
  %v523 = vmul.f32 %v521, %v521
  %v524 = vmul.f32 %v522, %v522
  %v525 = vsel %vm146, %v523, 0.0
  %526 = vadd.xlane.f32.xlu0 %v525
  %v527 = vpop.xlane.xlu0 %526
  %v528 = vsel %vm146, %v524, 0.0
  %529 = vadd.xlane.f32.xlu0 %v528
  %v530 = vpop.xlane.xlu0 %529
  %v531 = vmul.f32 %v527, %v518
  %v532 = vmul.f32 %v530, %v518
  %v533 = vadd.f32 %v531, 1e-05
  %v534 = vadd.f32 %v532, 1e-05
  %v535 = vrsqrt.pop %v533
  %v536 = vrsqrt.pop %v534
  %v537 = vmul.f32 %v521, %v535
  %v538 = vmul.f32 %v522, %v536
  %v539 = vlaneseq
  %v540 = vshrl.u32 %v539, 7
  %v541 = vsub.s32 2, %v540
  %v542 = vrot.slane %v47, %v541
  %v543 = vmul.f32 %v537, %v542
  %v544 = vmul.f32 %v538, %v542
  %v545 = vlaneseq
  %v546 = vshrl.u32 %v545, 7
  %v547 = vsub.s32 3, %v546
  %v548 = vrot.slane %v47, %v547
  %v549 = vadd.f32 %v543, %v548
  %v550 = vadd.f32 %v544, %v548
  %v551 = vlaneseq
  %v552 = vshrl.u32 %v551, 7
  %v553 = vsub.s32 0, %v552
  %v554 = vrot.slane %v47, %v553
  %v556 = vsel %vm146, %v549, 0
  %v559 = vsel %vm146, %v550, 0
  %561 = vmatprep.subr.mxu0 0.0
  %562 = vmatpush1.msra.mxu0 %v25
  %563 = vmatprep.subr.mxu0 0.0
  %564 = vmatpush1.msra.mxu0 %v26
  %565 = vmatprep.subr.mxu0 0.0
  %566 = vmatpush1.msra.mxu0 %v27
  %567 = vmatprep.subr.mxu0 0.0
  %568 = vmatpush1.msra.mxu0 %v28
  %569 = vmatprep.subr.mxu0 0.0
  %570 = vmatpush1.msra.mxu0 0.0
  %571 = vmatprep.subr.mxu0 0.0
  %572 = vmatpush1.msra.mxu0 0.0
  %573 = vmatprep.subr.mxu0 0.0
  %574 = vmatpush1.msra.mxu0 0.0
  %575 = vmatprep.subr.mxu0 0.0
  %576 = vmatpush1.msra.mxu0 0.0
  %577 = vmatprep.subr.mxu0 0.0
  %578 = vmatpush1.msra.mxu0 0.0
  %579 = vmatprep.subr.mxu0 0.0
  %580 = vmatpush1.msra.mxu0 0.0
  %581 = vmatprep.subr.mxu0 0.0
  %582 = vmatpush1.msra.mxu0 0.0
  %583 = vmatprep.subr.mxu0 0.0
  %584 = vmatpush1.msra.mxu0 0.0
  %585 = vmatprep.subr.mxu0 0.0
  %586 = vmatpush1.msra.mxu0 0.0
  %587 = vmatprep.subr.mxu0 0.0
  %588 = vmatpush1.msra.mxu0 0.0
  %589 = vmatprep.subr.mxu0 0.0
  %590 = vmatpush1.msra.mxu0 0.0
  %591 = vmatprep.subr.mxu0 0.0
  %592 = vmatpush1.msra.mxu0 0.0
  %593 = vmatprep.subr.mxu0 0.0
  %594 = vmatpush1.msra.mxu0 0.0
  %595 = vmatprep.subr.mxu0 0.0
  %596 = vmatpush1.msra.mxu0 0.0
  %597 = vmatprep.subr.mxu0 0.0
  %598 = vmatpush1.msra.mxu0 0.0
  %599 = vmatprep.subr.mxu0 0.0
  %600 = vmatpush1.msra.mxu0 0.0
  %601 = vmatprep.subr.mxu0 0.0
  %602 = vmatpush1.msra.mxu0 0.0
  %603 = vmatprep.subr.mxu0 0.0
  %604 = vmatpush1.msra.mxu0 0.0
  %605 = vmatprep.subr.mxu0 0.0
  %606 = vmatpush1.msra.mxu0 0.0
  %607 = vmatprep.subr.mxu0 0.0
  %608 = vmatpush1.msra.mxu0 0.0
  %609 = vmatprep.subr.mxu0 0.0
  %610 = vmatpush1.msra.mxu0 0.0
  %611 = vmatprep.subr.mxu0 0.0
  %612 = vmatpush1.msra.mxu0 0.0
  %613 = vmatprep.subr.mxu0 0.0
  %614 = vmatpush1.msra.mxu0 0.0
  %615 = vmatprep.subr.mxu0 0.0
  %616 = vmatpush1.msra.mxu0 0.0
  %617 = vmatprep.subr.mxu0 0.0
  %618 = vmatpush1.msra.mxu0 0.0
  %619 = vmatprep.subr.mxu0 0.0
  %620 = vmatpush1.msra.mxu0 0.0
  %621 = vmatprep.subr.mxu0 0.0
  %622 = vmatpush1.msra.mxu0 0.0
  %623 = vmatprep.subr.mxu0 0.0
  %624 = vmatpush1.msra.mxu0 0.0
  %625 = vmatprep.mubr.f32.mxu0 0.0
  %626 = vmatmul.mubr.f32.gmra.mrb[0].mxu0 %v556
  %v627 = vpop.f32.mrb[0].mxu0
  %v628 = vadd.f32 %v554, %v627
  %v629 = vpop.f32.mrb[0].mxu0
  %630 = vmatprep.mubr.f32.mxu0 0.0
  %631 = vmatmul.mubr.f32.gmra.mrb[0].mxu0 %v559
  %v632 = vpop.f32.mrb[0].mxu0
  %v633 = vadd.f32 %v554, %v632
  %v634 = vpop.f32.mrb[0].mxu0
  %635 = vdwg.mxu0
  %v636 = vmul.f32 %v628, %v628
  %v637 = vmul.f32 %v633, %v633
  %v638 = vmul.f32 %v628, %v636
  %v639 = vmul.f32 %v633, %v637
  %v640 = vmul.f32 %v638, 0.044715
  %v641 = vmul.f32 %v639, 0.044715
  %v642 = vadd.f32 %v628, %v640
  %v643 = vadd.f32 %v633, %v641
  %v644 = vmul.f32 %v642, 0.7978846
  %v645 = vmul.f32 %v643, 0.7978846
  %v646 = vtanh.pop %v644
  %v647 = vtanh.pop %v645
  %v648 = vadd.f32 %v646, 1.0
  %v649 = vadd.f32 %v647, 1.0
  %v650 = vmul.f32 %v648, 0.5
  %v651 = vmul.f32 %v649, 0.5
  %v652 = vmul.f32 %v628, %v650
  %v653 = vmul.f32 %v633, %v651
  %v654 = vlaneseq
  %v655 = vshrl.u32 %v654, 7
  %v656 = vsub.s32 1, %v655
  %v657 = vrot.slane %v47, %v656
  %v659 = vsel %vm64, %v652, 0
  %v662 = vsel %vm64, %v653, 0
  %664 = vmatprep.subr.mxu0 0.0
  %665 = vmatpush1.msra.mxu0 %v29
  %666 = vmatprep.subr.mxu0 0.0
  %667 = vmatpush1.msra.mxu0 %v30
  %668 = vmatprep.subr.mxu0 0.0
  %669 = vmatpush1.msra.mxu0 %v31
  %670 = vmatprep.subr.mxu0 0.0
  %671 = vmatpush1.msra.mxu0 %v32
  %672 = vmatprep.subr.mxu0 0.0
  %673 = vmatpush1.msra.mxu0 %v33
  %674 = vmatprep.subr.mxu0 0.0
  %675 = vmatpush1.msra.mxu0 %v34
  %676 = vmatprep.subr.mxu0 0.0
  %677 = vmatpush1.msra.mxu0 %v35
  %678 = vmatprep.subr.mxu0 0.0
  %679 = vmatpush1.msra.mxu0 %v36
  %680 = vmatprep.subr.mxu0 0.0
  %681 = vmatpush1.msra.mxu0 0.0
  %682 = vmatprep.subr.mxu0 0.0
  %683 = vmatpush1.msra.mxu0 0.0
  %684 = vmatprep.subr.mxu0 0.0
  %685 = vmatpush1.msra.mxu0 0.0
  %686 = vmatprep.subr.mxu0 0.0
  %687 = vmatpush1.msra.mxu0 0.0
  %688 = vmatprep.subr.mxu0 0.0
  %689 = vmatpush1.msra.mxu0 0.0
  %690 = vmatprep.subr.mxu0 0.0
  %691 = vmatpush1.msra.mxu0 0.0
  %692 = vmatprep.subr.mxu0 0.0
  %693 = vmatpush1.msra.mxu0 0.0
  %694 = vmatprep.subr.mxu0 0.0
  %695 = vmatpush1.msra.mxu0 0.0
  %696 = vmatprep.subr.mxu0 0.0
  %697 = vmatpush1.msra.mxu0 0.0
  %698 = vmatprep.subr.mxu0 0.0
  %699 = vmatpush1.msra.mxu0 0.0
  %700 = vmatprep.subr.mxu0 0.0
  %701 = vmatpush1.msra.mxu0 0.0
  %702 = vmatprep.subr.mxu0 0.0
  %703 = vmatpush1.msra.mxu0 0.0
  %704 = vmatprep.subr.mxu0 0.0
  %705 = vmatpush1.msra.mxu0 0.0
  %706 = vmatprep.subr.mxu0 0.0
  %707 = vmatpush1.msra.mxu0 0.0
  %708 = vmatprep.subr.mxu0 0.0
  %709 = vmatpush1.msra.mxu0 0.0
  %710 = vmatprep.subr.mxu0 0.0
  %711 = vmatpush1.msra.mxu0 0.0
  %712 = vmatprep.subr.mxu0 0.0
  %713 = vmatpush1.msra.mxu0 0.0
  %714 = vmatprep.subr.mxu0 0.0
  %715 = vmatpush1.msra.mxu0 0.0
  %716 = vmatprep.subr.mxu0 0.0
  %717 = vmatpush1.msra.mxu0 0.0
  %718 = vmatprep.subr.mxu0 0.0
  %719 = vmatpush1.msra.mxu0 0.0
  %720 = vmatprep.subr.mxu0 0.0
  %721 = vmatpush1.msra.mxu0 0.0
  %722 = vmatprep.subr.mxu0 0.0
  %723 = vmatpush1.msra.mxu0 0.0
  %724 = vmatprep.subr.mxu0 0.0
  %725 = vmatpush1.msra.mxu0 0.0
  %726 = vmatprep.subr.mxu0 0.0
  %727 = vmatpush1.msra.mxu0 0.0
  %728 = vmatprep.mubr.f32.mxu0 0.0
  %729 = vmatmul.mubr.f32.gmra.mrb[0].mxu0 %v659
  %v730 = vpop.f32.mrb[0].mxu0
  %v731 = vadd.f32 %v657, %v730
  %v732 = vpop.f32.mrb[0].mxu0
  %733 = vmatprep.mubr.f32.mxu0 0.0
  %734 = vmatmul.mubr.f32.gmra.mrb[0].mxu0 %v662
  %v735 = vpop.f32.mrb[0].mxu0
  %v736 = vadd.f32 %v657, %v735
  %v737 = vpop.f32.mrb[0].mxu0
  %738 = vdwg.mxu0
  %v739 = vadd.f32 %v549, %v731
  %v740 = vadd.f32 %v550, %v736
  %v741 = vsel %vm146, %v739, 0.0
  %742 = vadd.xlane.f32.xlu0 %v741
  %v743 = vpop.xlane.xlu0 %742
  %v744 = vsel %vm146, %v740, 0.0
  %745 = vadd.xlane.f32.xlu0 %v744
  %v746 = vpop.xlane.xlu0 %745
  %v747 = vmul.f32 %v743, %v518
  %v748 = vmul.f32 %v746, %v518
  %v749 = vsub.f32 %v739, %v747
  %v750 = vsub.f32 %v740, %v748
  %v751 = vmul.f32 %v749, %v749
  %v752 = vmul.f32 %v750, %v750
  %v753 = vsel %vm146, %v751, 0.0
  %754 = vadd.xlane.f32.xlu0 %v753
  %v755 = vpop.xlane.xlu0 %754
  %v756 = vsel %vm146, %v752, 0.0
  %757 = vadd.xlane.f32.xlu0 %v756
  %v758 = vpop.xlane.xlu0 %757
  %v759 = vmul.f32 %v755, %v518
  %v760 = vmul.f32 %v758, %v518
  %v761 = vadd.f32 %v759, 1e-05
  %v762 = vadd.f32 %v760, 1e-05
  %v763 = vrsqrt.pop %v761
  %v764 = vrsqrt.pop %v762
  %v765 = vmul.f32 %v749, %v763
  %v766 = vmul.f32 %v750, %v764
  %v767 = vlaneseq
  %v768 = vshrl.u32 %v767, 7
  %v769 = vsub.s32 4, %v768
  %v770 = vrot.slane %v47, %v769
  %v771 = vmul.f32 %v765, %v770
  %v772 = vmul.f32 %v766, %v770
  %v773 = vlaneseq
  %v774 = vshrl.u32 %v773, 7
  %v775 = vsub.s32 5, %v774
  %v776 = vrot.slane %v47, %v775
  %v777 = vadd.f32 %v771, %v776
  %v778 = vadd.f32 %v772, %v776
  %v779 = vlaneseq
  %v780 = vshrl.u32 %v779, 7
  %v781 = vsub.s32 0, %v780
  %v782 = vrot.slane %v777, %v781
  %v783 = vlaneseq
  %v784 = vshrl.u32 %v783, 7
  %v785 = vsub.s32 0, %v784
  %v786 = vrot.slane %v778, %v785
  %v787 = vld [vmem:[%s3 + $0xa0] sm:$0xff]
  %v788 = vld [vmem:[%s3 + $0xa8] sm:$0xff]
  %v789 = vld [vmem:[%s3 + $0xb0] sm:$0xff]
  %v790 = vld [vmem:[%s3 + $0xb8] sm:$0xff]
  %v791 = vld [vmem:[%s3 + $0xc0] sm:$0xff]
  %v792 = vld [vmem:[%s3 + $0xc8] sm:$0xff]
  %v793 = vld [vmem:[%s3 + $0xd0] sm:$0xff]
  %v794 = vld [vmem:[%s3 + $0xd8] sm:$0xff]
  %v795 = vld [vmem:[%s3 + $0x160] sm:$0xff]
  %v796 = vld [vmem:[%s3 + $0x168] sm:$0xff]
  %v797 = vld [vmem:[%s3 + $0x170] sm:$0xff]
  %v798 = vld [vmem:[%s3 + $0x178] sm:$0xff]
  %v799 = vmul.f32 %v782, %v787
  %v800 = vmul.f32 %v782, %v788
  %v801 = vmul.f32 %v786, %v789
  %v802 = vmul.f32 %v786, %v790
  %v803 = vsel %vm146, %v799, 0.0
  %804 = vadd.xlane.f32.xlu0 %v803
  %v805 = vpop.xlane.xlu0 %804
  %v806 = vsel %vm146, %v800, 0.0
  %807 = vadd.xlane.f32.xlu0 %v806
  %v808 = vpop.xlane.xlu0 %807
  %v809 = vsel %vm146, %v801, 0.0
  %810 = vadd.xlane.f32.xlu0 %v809
  %v811 = vpop.xlane.xlu0 %810
  %v812 = vsel %vm146, %v802, 0.0
  %813 = vadd.xlane.f32.xlu0 %v812
  %v814 = vpop.xlane.xlu0 %813
  %v815 = vadd.f32 %v805, %v795
  %v816 = vadd.f32 %v808, %v796
  %v817 = vadd.f32 %v811, %v797
  %v818 = vadd.f32 %v814, %v798
  %v819 = vmul.f32 %v782, %v791
  %v820 = vmul.f32 %v782, %v792
  %v821 = vmul.f32 %v786, %v793
  %v822 = vmul.f32 %v786, %v794
  %v823 = vsel %vm146, %v819, 0.0
  %824 = vadd.xlane.f32.xlu0 %v823
  %v825 = vpop.xlane.xlu0 %824
  %v826 = vsel %vm146, %v820, 0.0
  %827 = vadd.xlane.f32.xlu0 %v826
  %v828 = vpop.xlane.xlu0 %827
  %v829 = vsel %vm146, %v821, 0.0
  %830 = vadd.xlane.f32.xlu0 %v829
  %v831 = vpop.xlane.xlu0 %830
  %v832 = vsel %vm146, %v822, 0.0
  %833 = vadd.xlane.f32.xlu0 %v832
  %v834 = vpop.xlane.xlu0 %833
  %v835 = vadd.f32 %v825, %v795
  %v836 = vadd.f32 %v828, %v796
  %v837 = vadd.f32 %v831, %v797
  %v838 = vadd.f32 %v834, %v798
  %v839 = vld [vmem:[%s3 + $0xe0] sm:$0xff]
  %v840 = vld [vmem:[%s3 + $0xe8] sm:$0xff]
  %v841 = vld [vmem:[%s3 + $0xf0] sm:$0xff]
  %v842 = vld [vmem:[%s3 + $0xf8] sm:$0xff]
  %v843 = vld [vmem:[%s3 + $0x100] sm:$0xff]
  %v844 = vld [vmem:[%s2] sm:$0xff]
  %v845 = vld [vmem:[%s2 + $0x8] sm:$0xff]
  %847 = vset.pattern.permute.xlu0 2
  %848 = vperm.xlu0 %847, %v795
  %v849 = vpop.permute.xlu0 %848
  %852 = vset.pattern.permute.xlu0 2
  %853 = vperm.xlu0 %852, %v796
  %v854 = vpop.permute.xlu0 %853
  %857 = vset.pattern.permute.xlu0 2
  %858 = vperm.xlu0 %857, %v797
  %v859 = vpop.permute.xlu0 %858
  %862 = vset.pattern.permute.xlu0 2
  %863 = vperm.xlu0 %862, %v798
  %v864 = vpop.permute.xlu0 %863
  %vm866 = vcmask 64512
  %v868 = vsel %vm866, %v839, 0
  %v871 = vsel %vm866, %v840, 0
  %v874 = vsel %vm866, %v841, 0
  %v877 = vsel %vm866, %v842, 0
  %879 = vmatprep.subr.mxu0 %v845
  %880 = vmatpush1.msra.mxu0 %v844
  %881 = vmatprep.subr.mxu0 0.0
  %882 = vmatpush1.msra.mxu0 0.0
  %883 = vmatprep.subr.mxu0 0.0
  %884 = vmatpush1.msra.mxu0 0.0
  %885 = vmatprep.subr.mxu0 0.0
  %886 = vmatpush1.msra.mxu0 0.0
  %887 = vmatprep.subr.mxu0 0.0
  %888 = vmatpush1.msra.mxu0 0.0
  %889 = vmatprep.subr.mxu0 0.0
  %890 = vmatpush1.msra.mxu0 0.0
  %891 = vmatprep.subr.mxu0 0.0
  %892 = vmatpush1.msra.mxu0 0.0
  %893 = vmatprep.subr.mxu0 0.0
  %894 = vmatpush1.msra.mxu0 0.0
  %895 = vmatprep.subr.mxu0 0.0
  %896 = vmatpush1.msra.mxu0 0.0
  %897 = vmatprep.subr.mxu0 0.0
  %898 = vmatpush1.msra.mxu0 0.0
  %899 = vmatprep.subr.mxu0 0.0
  %900 = vmatpush1.msra.mxu0 0.0
  %901 = vmatprep.subr.mxu0 0.0
  %902 = vmatpush1.msra.mxu0 0.0
  %903 = vmatprep.subr.mxu0 0.0
  %904 = vmatpush1.msra.mxu0 0.0
  %905 = vmatprep.subr.mxu0 0.0
  %906 = vmatpush1.msra.mxu0 0.0
  %907 = vmatprep.subr.mxu0 0.0
  %908 = vmatpush1.msra.mxu0 0.0
  %909 = vmatprep.subr.mxu0 0.0
  %910 = vmatpush1.msra.mxu0 0.0
  %911 = vmatprep.subr.mxu0 0.0
  %912 = vmatpush1.msra.mxu0 0.0
  %913 = vmatprep.subr.mxu0 0.0
  %914 = vmatpush1.msra.mxu0 0.0
  %915 = vmatprep.subr.mxu0 0.0
  %916 = vmatpush1.msra.mxu0 0.0
  %917 = vmatprep.subr.mxu0 0.0
  %918 = vmatpush1.msra.mxu0 0.0
  %919 = vmatprep.subr.mxu0 0.0
  %920 = vmatpush1.msra.mxu0 0.0
  %921 = vmatprep.subr.mxu0 0.0
  %922 = vmatpush1.msra.mxu0 0.0
  %923 = vmatprep.subr.mxu0 0.0
  %924 = vmatpush1.msra.mxu0 0.0
  %925 = vmatprep.subr.mxu0 0.0
  %926 = vmatpush1.msra.mxu0 0.0
  %927 = vmatprep.subr.mxu0 0.0
  %928 = vmatpush1.msra.mxu0 0.0
  %929 = vmatprep.subr.mxu0 0.0
  %930 = vmatpush1.msra.mxu0 0.0
  %931 = vmatprep.subr.mxu0 0.0
  %932 = vmatpush1.msra.mxu0 0.0
  %933 = vmatprep.subr.mxu0 0.0
  %934 = vmatpush1.msra.mxu0 0.0
  %935 = vmatprep.subr.mxu0 0.0
  %936 = vmatpush1.msra.mxu0 0.0
  %937 = vmatprep.subr.mxu0 0.0
  %938 = vmatpush1.msra.mxu0 0.0
  %939 = vmatprep.subr.mxu0 0.0
  %940 = vmatpush1.msra.mxu0 0.0
  %941 = vmatprep.subr.mxu0 0.0
  %942 = vmatpush1.msra.mxu0 0.0
  %943 = vmatprep.mubr.f32.mxu0 0.0
  %944 = vmatmul.mubr.f32.gmra.mrb[0].mxu0 %v868
  %v945 = vpop.f32.mrb[0].mxu0
  %v946 = vadd.f32 %v849, %v945
  %v947 = vpop.f32.mrb[0].mxu0
  %v948 = vadd.f32 %v849, %v947
  %949 = vmatprep.mubr.f32.mxu0 0.0
  %950 = vmatmul.mubr.f32.gmra.mrb[0].mxu0 %v871
  %v951 = vpop.f32.mrb[0].mxu0
  %v952 = vadd.f32 %v854, %v951
  %v953 = vpop.f32.mrb[0].mxu0
  %v954 = vadd.f32 %v854, %v953
  %955 = vmatprep.mubr.f32.mxu0 0.0
  %956 = vmatmul.mubr.f32.gmra.mrb[0].mxu0 %v874
  %v957 = vpop.f32.mrb[0].mxu0
  %v958 = vadd.f32 %v859, %v957
  %v959 = vpop.f32.mrb[0].mxu0
  %v960 = vadd.f32 %v859, %v959
  %961 = vmatprep.mubr.f32.mxu0 0.0
  %962 = vmatmul.mubr.f32.gmra.mrb[0].mxu0 %v877
  %v963 = vpop.f32.mrb[0].mxu0
  %v964 = vadd.f32 %v864, %v963
  %v965 = vpop.f32.mrb[0].mxu0
  %v966 = vadd.f32 %v864, %v965
  %967 = vdwg.mxu0
  %v968 = vadd.f32 %v815, 1.0
  %v969 = vadd.f32 %v816, 1.0
  %v970 = vadd.f32 %v817, 1.0
  %v971 = vadd.f32 %v818, 1.0
  %973 = vset.pattern.permute.xlu0 0
  %974 = vperm.xlu0 %973, %v968
  %v975 = vpop.permute.xlu0 %974
  %978 = vset.pattern.permute.xlu0 0
  %979 = vperm.xlu0 %978, %v969
  %v980 = vpop.permute.xlu0 %979
  %983 = vset.pattern.permute.xlu0 0
  %984 = vperm.xlu0 %983, %v970
  %v985 = vpop.permute.xlu0 %984
  %988 = vset.pattern.permute.xlu0 0
  %989 = vperm.xlu0 %988, %v971
  %v990 = vpop.permute.xlu0 %989
  %v992 = vmul.f32 %v946, %v975
  %v993 = vmul.f32 %v948, %v975
  %v994 = vmul.f32 %v952, %v980
  %v995 = vmul.f32 %v954, %v980
  %v996 = vmul.f32 %v958, %v985
  %v997 = vmul.f32 %v960, %v985
  %v998 = vmul.f32 %v964, %v990
  %v999 = vmul.f32 %v966, %v990
  %1001 = vset.pattern.permute.xlu0 1
  %1002 = vperm.xlu0 %1001, %v835
  %v1003 = vpop.permute.xlu0 %1002
  %1006 = vset.pattern.permute.xlu0 1
  %1007 = vperm.xlu0 %1006, %v836
  %v1008 = vpop.permute.xlu0 %1007
  %1011 = vset.pattern.permute.xlu0 1
  %1012 = vperm.xlu0 %1011, %v837
  %v1013 = vpop.permute.xlu0 %1012
  %1016 = vset.pattern.permute.xlu0 1
  %1017 = vperm.xlu0 %1016, %v838
  %v1018 = vpop.permute.xlu0 %1017
  %v1020 = vadd.f32 %v992, %v1003
  %v1021 = vadd.f32 %v993, %v1003
  %v1022 = vadd.f32 %v994, %v1008
  %v1023 = vadd.f32 %v995, %v1008
  %v1024 = vadd.f32 %v996, %v1013
  %v1025 = vadd.f32 %v997, %v1013
  %v1026 = vadd.f32 %v998, %v1018
  %v1027 = vadd.f32 %v999, %v1018
  %v1028 = vmax.f32 %v1020, 0.0
  %v1029 = vmax.f32 %v1021, 0.0
  %v1030 = vmax.f32 %v1022, 0.0
  %v1031 = vmax.f32 %v1023, 0.0
  %v1032 = vmax.f32 %v1024, 0.0
  %v1033 = vmax.f32 %v1025, 0.0
  %v1034 = vmax.f32 %v1026, 0.0
  %v1035 = vmax.f32 %v1027, 0.0
  %1036 = vset.pattern.permute.xlu0 3
  %1037 = vperm.xlu0 %1036, %v795
  %v1038 = vpop.permute.xlu0 %1037
  %v1041 = vsel %vm146, %v843, 0
  %1043 = vmatprep.subr.mxu0 %v1029
  %1044 = vmatpush1.msra.mxu0 %v1028
  %1045 = vmatprep.subr.mxu0 %v1031
  %1046 = vmatpush1.msra.mxu0 %v1030
  %1047 = vmatprep.subr.mxu0 %v1033
  %1048 = vmatpush1.msra.mxu0 %v1032
  %1049 = vmatprep.subr.mxu0 %v1035
  %1050 = vmatpush1.msra.mxu0 %v1034
  %1051 = vmatprep.subr.mxu0 0.0
  %1052 = vmatpush1.msra.mxu0 0.0
  %1053 = vmatprep.subr.mxu0 0.0
  %1054 = vmatpush1.msra.mxu0 0.0
  %1055 = vmatprep.subr.mxu0 0.0
  %1056 = vmatpush1.msra.mxu0 0.0
  %1057 = vmatprep.subr.mxu0 0.0
  %1058 = vmatpush1.msra.mxu0 0.0
  %1059 = vmatprep.subr.mxu0 0.0
  %1060 = vmatpush1.msra.mxu0 0.0
  %1061 = vmatprep.subr.mxu0 0.0
  %1062 = vmatpush1.msra.mxu0 0.0
  %1063 = vmatprep.subr.mxu0 0.0
  %1064 = vmatpush1.msra.mxu0 0.0
  %1065 = vmatprep.subr.mxu0 0.0
  %1066 = vmatpush1.msra.mxu0 0.0
  %1067 = vmatprep.subr.mxu0 0.0
  %1068 = vmatpush1.msra.mxu0 0.0
  %1069 = vmatprep.subr.mxu0 0.0
  %1070 = vmatpush1.msra.mxu0 0.0
  %1071 = vmatprep.subr.mxu0 0.0
  %1072 = vmatpush1.msra.mxu0 0.0
  %1073 = vmatprep.subr.mxu0 0.0
  %1074 = vmatpush1.msra.mxu0 0.0
  %1075 = vmatprep.subr.mxu0 0.0
  %1076 = vmatpush1.msra.mxu0 0.0
  %1077 = vmatprep.subr.mxu0 0.0
  %1078 = vmatpush1.msra.mxu0 0.0
  %1079 = vmatprep.subr.mxu0 0.0
  %1080 = vmatpush1.msra.mxu0 0.0
  %1081 = vmatprep.subr.mxu0 0.0
  %1082 = vmatpush1.msra.mxu0 0.0
  %1083 = vmatprep.subr.mxu0 0.0
  %1084 = vmatpush1.msra.mxu0 0.0
  %1085 = vmatprep.subr.mxu0 0.0
  %1086 = vmatpush1.msra.mxu0 0.0
  %1087 = vmatprep.subr.mxu0 0.0
  %1088 = vmatpush1.msra.mxu0 0.0
  %1089 = vmatprep.subr.mxu0 0.0
  %1090 = vmatpush1.msra.mxu0 0.0
  %1091 = vmatprep.subr.mxu0 0.0
  %1092 = vmatpush1.msra.mxu0 0.0
  %1093 = vmatprep.subr.mxu0 0.0
  %1094 = vmatpush1.msra.mxu0 0.0
  %1095 = vmatprep.subr.mxu0 0.0
  %1096 = vmatpush1.msra.mxu0 0.0
  %1097 = vmatprep.subr.mxu0 0.0
  %1098 = vmatpush1.msra.mxu0 0.0
  %1099 = vmatprep.subr.mxu0 0.0
  %1100 = vmatpush1.msra.mxu0 0.0
  %1101 = vmatprep.subr.mxu0 0.0
  %1102 = vmatpush1.msra.mxu0 0.0
  %1103 = vmatprep.subr.mxu0 0.0
  %1104 = vmatpush1.msra.mxu0 0.0
  %1105 = vmatprep.subr.mxu0 0.0
  %1106 = vmatpush1.msra.mxu0 0.0
  %1107 = vmatprep.mubr.f32.mxu0 0.0
  %1108 = vmatmul.mubr.f32.gmra.mrb[0].mxu0 %v1041
  %v1109 = vpop.f32.mrb[0].mxu0
  %v1110 = vadd.f32 %v1038, %v1109
  %v1111 = vpop.f32.mrb[0].mxu0
  %v1112 = vadd.f32 %v1038, %v1111
  %1113 = vdwg.mxu0
  %1114 = vst [vmem:[%s4] sm:$0xff] %v1110
  %1115 = vst [vmem:[%s4 + $0x8] sm:$0xff] %v1112
  // Predicated region
  $region18: #{model_forward.1} parent=0 // pred_check
    _
  $region19: #{model_forward.1} parent=0 // pred_check_branch
    %1117 = sbr.rel (0) target = $region21
  $region20: #{model_forward.1} parent=0 // pred_region
    _
  $region21: #{model_forward.1} parent=0 // pred_fallthru
    _
  // Predicated region
  $region22: #{model_forward.1} parent=0 // pred_check
    _
  $region23: #{model_forward.1} parent=0 // pred_check_branch
    %1119 = sbr.rel (0) target = $region25
  $region24: #{model_forward.1} parent=0 // pred_region
    _
  $region25: #{model_forward.1} parent=0 // pred_fallthru
    _

</llo_original>
